<compile_context>
chip_gen: v7x
topology: tpu7x:2x2x1
jax: 0.10.0
libtpu: 0.0.40
codegen_flags: <defaults>
</compile_context>

<pallas_src>
import functools

import jax
import jax.numpy as jnp
from jax.experimental import pallas as pl
from jax.experimental.pallas import tpu as pltpu  # noqa: F401  (TPU backend)

EPS = 1e-5
LANE = 128  # vreg lane width; all feature dims zero-padded to 128 inside the slab

# ---- single parameter-slab layout: rows of a (520, 128) f32 array -----------
_W0, _W1, _WP0, _WP1 = 0, 128, 256, 384            # four 128-row weight blocks
_B0, _G0, _BE0, _G1, _BE1 = 512, 513, 514, 515, 516  # vector rows
SLAB_ROWS = 520                                     # padded to a multiple of 8


def branch_kernel(x_ref, p_ref, out_ref, *, in_dim, out_dim):
    """Fused Branch forward, single invocation (no grid).

    x_ref  : (N, in_dim)        raw (un-padded) input activations
    p_ref  : (520, 128)         merged parameter slab (weights + vectors)
    out_ref: (N, out_dim)       final projector output
    """
    x = x_ref[...]

    b0 = p_ref[_B0:_B0 + 1, :]
    g0, be0 = p_ref[_G0:_G0 + 1, :], p_ref[_BE0:_BE0 + 1, :]
    g1, be1 = p_ref[_G1:_G1 + 1, :], p_ref[_BE1:_BE1 + 1, :]

    # ---------------- encoder: Linear -> ReLU -> Linear ----------------
    # K trimmed to the true in_dim (no padded zero rows multiplied).
    h = jnp.dot(x, p_ref[_W0:_W0 + in_dim, :],
                preferred_element_type=jnp.float32) + b0
    h = jnp.maximum(h, 0.0)
    # encoder bias b1 omitted: constant row cancels exactly in the next BN.
    h = jnp.dot(h, p_ref[_W1:_W1 + LANE, :], preferred_element_type=jnp.float32)

    # ---- projector layer 0: Linear (bias cancels) -> BN -> ReLU ----
    z = jnp.dot(h, p_ref[_WP0:_WP0 + LANE, :], preferred_element_type=jnp.float32)
    mu = jnp.mean(z, axis=0, keepdims=True)
    d = z - mu
    var = jnp.mean(d * d, axis=0, keepdims=True)
    scale = g0 * jax.lax.rsqrt(var + EPS)          # (1,128) stats-row work only
    z = jnp.maximum(d * scale + be0, 0.0)

    # ---- projector layer 1: Linear (bias cancels) -> BN (no ReLU) ----
    z = jnp.dot(z, p_ref[_WP1:_WP1 + LANE, :], preferred_element_type=jnp.float32)
    mu = jnp.mean(z, axis=0, keepdims=True)
    d = z - mu
    var = jnp.mean(d * d, axis=0, keepdims=True)
    scale = g1 * jax.lax.rsqrt(var + EPS)
    y = d * scale + be1                            # (N, 128); cols >= out_dim are 0
    out_ref[...] = y[:, :out_dim]


@functools.partial(jax.jit, static_argnames=("proj_out",))
def branch_forward(x, param_slab, proj_out=32):
    """x: (N, in_dim) f32.  param_slab: (520, 128) f32.  Returns (N, proj_out) f32."""
    n, in_dim = x.shape
    kernel = functools.partial(branch_kernel, in_dim=in_dim, out_dim=proj_out)
    # Gridless single invocation: only 2 input DMAs + 1 output DMA, everything
    # resident in VMEM.  Fine for small/medium N (re-tile before N ~ tens of
    # thousands on v7x's 64 MiB VMEM).
    return pl.pallas_call(
        kernel,
        out_shape=jax.ShapeDtypeStruct((n, proj_out), jnp.float32),
    )(x, param_slab)


# ----------------------------- parameter helpers ------------------------------

def _linear_init(key, fan_in, fan_out):
    """PyTorch nn.Linear default init: uniform(-1/sqrt(fan_in), 1/sqrt(fan_in))."""
    kw, kb = jax.random.split(key)
    bound = 1.0 / jnp.sqrt(float(fan_in))
    w = jax.random.uniform(kw, (fan_in, fan_out), jnp.float32, -bound, bound)
    b = jax.random.uniform(kb, (fan_out,), jnp.float32, -bound, bound)
    return w, b


def init_params(key, in_dim=32, enc_hidden=48, repr_dim=64, proj_out=32):
    proj_hidden = (proj_out + repr_dim) // 2  # 48
    k0, k1, k2, k3 = jax.random.split(key, 4)
    w0, b0 = _linear_init(k0, in_dim, enc_hidden)
    w1, b1 = _linear_init(k1, enc_hidden, repr_dim)
    wp0, bp0 = _linear_init(k2, repr_dim, proj_hidden)
    wp1, bp1 = _linear_init(k3, proj_hidden, proj_out)
    return dict(
        w0=w0, b0=b0, w1=w1, b1=b1,
        wp0=wp0, bp0=bp0, wp1=wp1, bp1=bp1,
        g0=jnp.ones((proj_hidden,), jnp.float32), be0=jnp.zeros((proj_hidden,), jnp.float32),
        g1=jnp.ones((proj_out,), jnp.float32), be1=jnp.zeros((proj_out,), jnp.float32),
    )


def pack_slab(p):
    """Pack all kernel-visible parameters into one contiguous (520,128) f32 slab.

    b1 / bp0 / bp1 are intentionally NOT packed: each is a per-feature constant
    added immediately before a training-mode BatchNorm and cancels exactly.
    """
    slab = jnp.zeros((SLAB_ROWS, LANE), jnp.float32)
    for row, w in ((_W0, p["w0"]), (_W1, p["w1"]), (_WP0, p["wp0"]), (_WP1, p["wp1"])):
        slab = slab.at[row:row + w.shape[0], :w.shape[1]].set(w)
    for row, v in ((_B0, p["b0"]), (_G0, p["g0"]), (_BE0, p["be0"]),
                   (_G1, p["g1"]), (_BE1, p["be1"])):
        slab = slab.at[row, :v.shape[0]].set(v)
    return slab


def branch_reference(x, p):
    """Pure-JAX reference (f32, HIGHEST precision, all biases kept) for checking."""
    hp = jax.lax.Precision.HIGHEST

    def bn(z, g, b):
        mu = z.mean(0, keepdims=True)
        var = ((z - mu) ** 2).mean(0, keepdims=True)  # biased (training-mode)
        return (z - mu) * jax.lax.rsqrt(var + EPS) * g + b

    h = jnp.maximum(jnp.dot(x, p["w0"], precision=hp) + p["b0"], 0.0)
    h = jnp.dot(h, p["w1"], precision=hp) + p["b1"]
    z = jnp.maximum(bn(jnp.dot(h, p["wp0"], precision=hp) + p["bp0"],
                       p["g0"], p["be0"]), 0.0)
    return bn(jnp.dot(z, p["wp1"], precision=hp) + p["bp1"], p["g1"], p["be1"])


if __name__ == "__main__":
    key = jax.random.PRNGKey(0)
    k_x, k_p = jax.random.split(key)

    batch, in_dim, enc_hidden, repr_dim, proj_out = 64, 32, 48, 64, 32
    params = init_params(k_p, in_dim=in_dim, enc_hidden=enc_hidden,
                         repr_dim=repr_dim, proj_out=proj_out)
    param_slab = pack_slab(params)
    x = jax.random.normal(k_x, (batch, in_dim), jnp.float32)

    out = jax.block_until_ready(branch_forward(x, param_slab, proj_out=proj_out))
    assert out.shape == (batch, proj_out) and out.dtype == jnp.float32

    ref = branch_reference(x, params)
    max_err = float(jnp.max(jnp.abs(out - ref)))
    assert jnp.allclose(out, ref, atol=1e-2, rtol=1e-2), max_err

    print("KERNEL_OK")
</pallas_src>

<mosaic_0001>
module attributes {stable_mosaic.version = 11 : i64} {
  func.func @branch_kernel(%arg0: memref<64x32xf32, #tpu.memory_space<vmem>>, %arg1: memref<520x128xf32, #tpu.memory_space<vmem>>, %arg2: memref<64x32xf32, #tpu.memory_space<vmem>>) attributes {dimension_semantics = [], scalar_prefetch = 0 : i64, scratch_operands = 0 : i64, tpu.core_type = #tpu.core_type<tc>} {
    %c0 = arith.constant 0 : index
    %c0_0 = arith.constant 0 : index
    %0 = vector.load %arg0[%c0, %c0_0] : memref<64x32xf32, #tpu.memory_space<vmem>>, vector<64x32xf32>
    %c512 = arith.constant 512 : index
    %c0_1 = arith.constant 0 : index
    %1 = vector.load %arg1[%c512, %c0_1] : memref<520x128xf32, #tpu.memory_space<vmem>>, vector<1x128xf32>
    %c513 = arith.constant 513 : index
    %c0_2 = arith.constant 0 : index
    %2 = vector.load %arg1[%c513, %c0_2] : memref<520x128xf32, #tpu.memory_space<vmem>>, vector<1x128xf32>
    %c514 = arith.constant 514 : index
    %c0_3 = arith.constant 0 : index
    %3 = vector.load %arg1[%c514, %c0_3] : memref<520x128xf32, #tpu.memory_space<vmem>>, vector<1x128xf32>
    %c515 = arith.constant 515 : index
    %c0_4 = arith.constant 0 : index
    %4 = vector.load %arg1[%c515, %c0_4] : memref<520x128xf32, #tpu.memory_space<vmem>>, vector<1x128xf32>
    %c516 = arith.constant 516 : index
    %c0_5 = arith.constant 0 : index
    %5 = vector.load %arg1[%c516, %c0_5] : memref<520x128xf32, #tpu.memory_space<vmem>>, vector<1x128xf32>
    %c0_6 = arith.constant 0 : index
    %c0_7 = arith.constant 0 : index
    %6 = vector.load %arg1[%c0_6, %c0_7] : memref<520x128xf32, #tpu.memory_space<vmem>>, vector<32x128xf32>
    %cst = arith.constant dense<0.000000e+00> : vector<64x128xf32>
    %7 = tpu.matmul %0, %6, %cst {dimension_numbers = #tpu.dot_dimension_numbers<[1], [0], [0], [1], [0, 0, 1, 1], [], []>} : vector<64x32xf32>, vector<32x128xf32>, vector<64x128xf32> -> vector<64x128xf32>
    %8 = vector.broadcast %1 : vector<1x128xf32> to vector<64x128xf32>
    %9 = arith.addf %7, %8 : vector<64x128xf32>
    %cst_8 = arith.constant 0.000000e+00 : f32
    %10 = vector.broadcast %cst_8 : f32 to vector<64x128xf32>
    %11 = arith.maximumf %9, %10 : vector<64x128xf32>
    %c128 = arith.constant 128 : index
    %c0_9 = arith.constant 0 : index
    %12 = vector.load %arg1[%c128, %c0_9] : memref<520x128xf32, #tpu.memory_space<vmem>>, vector<128x128xf32>
    %cst_10 = arith.constant dense<0.000000e+00> : vector<64x128xf32>
    %13 = tpu.matmul %11, %12, %cst_10 {dimension_numbers = #tpu.dot_dimension_numbers<[1], [0], [0], [1], [0, 0, 1, 1], [], []>} : vector<64x128xf32>, vector<128x128xf32>, vector<64x128xf32> -> vector<64x128xf32>
    %c256 = arith.constant 256 : index
    %c0_11 = arith.constant 0 : index
    %14 = vector.load %arg1[%c256, %c0_11] : memref<520x128xf32, #tpu.memory_space<vmem>>, vector<128x128xf32>
    %cst_12 = arith.constant dense<0.000000e+00> : vector<64x128xf32>
    %15 = tpu.matmul %13, %14, %cst_12 {dimension_numbers = #tpu.dot_dimension_numbers<[1], [0], [0], [1], [0, 0, 1, 1], [], []>} : vector<64x128xf32>, vector<128x128xf32>, vector<64x128xf32> -> vector<64x128xf32>
    %cst_13 = arith.constant dense<0.000000e+00> : vector<128xf32>
    %16 = vector.multi_reduction <add>, %15, %cst_13 [0] : vector<64x128xf32> to vector<128xf32>
    %17 = vector.shape_cast %16 : vector<128xf32> to vector<1x128xf32>
    %cst_14 = arith.constant 6.400000e+01 : f32
    %18 = vector.broadcast %cst_14 : f32 to vector<1x128xf32>
    %19 = arith.divf %17, %18 : vector<1x128xf32>
    %20 = vector.broadcast %19 : vector<1x128xf32> to vector<64x128xf32>
    %21 = arith.subf %15, %20 : vector<64x128xf32>
    %22 = arith.mulf %21, %21 : vector<64x128xf32>
    %cst_15 = arith.constant dense<0.000000e+00> : vector<128xf32>
    %23 = vector.multi_reduction <add>, %22, %cst_15 [0] : vector<64x128xf32> to vector<128xf32>
    %24 = vector.shape_cast %23 : vector<128xf32> to vector<1x128xf32>
    %cst_16 = arith.constant 6.400000e+01 : f32
    %25 = vector.broadcast %cst_16 : f32 to vector<1x128xf32>
    %26 = arith.divf %24, %25 : vector<1x128xf32>
    %cst_17 = arith.constant 9.99999974E-6 : f32
    %27 = vector.broadcast %cst_17 : f32 to vector<1x128xf32>
    %28 = arith.addf %26, %27 : vector<1x128xf32>
    %29 = math.rsqrt %28 : vector<1x128xf32>
    %30 = arith.mulf %2, %29 : vector<1x128xf32>
    %31 = vector.broadcast %30 : vector<1x128xf32> to vector<64x128xf32>
    %32 = arith.mulf %21, %31 : vector<64x128xf32>
    %33 = vector.broadcast %3 : vector<1x128xf32> to vector<64x128xf32>
    %34 = arith.addf %32, %33 : vector<64x128xf32>
    %cst_18 = arith.constant 0.000000e+00 : f32
    %35 = vector.broadcast %cst_18 : f32 to vector<64x128xf32>
    %36 = arith.maximumf %34, %35 : vector<64x128xf32>
    %c384 = arith.constant 384 : index
    %c0_19 = arith.constant 0 : index
    %37 = vector.load %arg1[%c384, %c0_19] : memref<520x128xf32, #tpu.memory_space<vmem>>, vector<128x128xf32>
    %cst_20 = arith.constant dense<0.000000e+00> : vector<64x128xf32>
    %38 = tpu.matmul %36, %37, %cst_20 {dimension_numbers = #tpu.dot_dimension_numbers<[1], [0], [0], [1], [0, 0, 1, 1], [], []>} : vector<64x128xf32>, vector<128x128xf32>, vector<64x128xf32> -> vector<64x128xf32>
    %cst_21 = arith.constant dense<0.000000e+00> : vector<128xf32>
    %39 = vector.multi_reduction <add>, %38, %cst_21 [0] : vector<64x128xf32> to vector<128xf32>
    %40 = vector.shape_cast %39 : vector<128xf32> to vector<1x128xf32>
    %cst_22 = arith.constant 6.400000e+01 : f32
    %41 = vector.broadcast %cst_22 : f32 to vector<1x128xf32>
    %42 = arith.divf %40, %41 : vector<1x128xf32>
    %43 = vector.broadcast %42 : vector<1x128xf32> to vector<64x128xf32>
    %44 = arith.subf %38, %43 : vector<64x128xf32>
    %45 = arith.mulf %44, %44 : vector<64x128xf32>
    %cst_23 = arith.constant dense<0.000000e+00> : vector<128xf32>
    %46 = vector.multi_reduction <add>, %45, %cst_23 [0] : vector<64x128xf32> to vector<128xf32>
    %47 = vector.shape_cast %46 : vector<128xf32> to vector<1x128xf32>
    %cst_24 = arith.constant 6.400000e+01 : f32
    %48 = vector.broadcast %cst_24 : f32 to vector<1x128xf32>
    %49 = arith.divf %47, %48 : vector<1x128xf32>
    %cst_25 = arith.constant 9.99999974E-6 : f32
    %50 = vector.broadcast %cst_25 : f32 to vector<1x128xf32>
    %51 = arith.addf %49, %50 : vector<1x128xf32>
    %52 = math.rsqrt %51 : vector<1x128xf32>
    %53 = arith.mulf %4, %52 : vector<1x128xf32>
    %54 = vector.broadcast %53 : vector<1x128xf32> to vector<64x128xf32>
    %55 = arith.mulf %44, %54 : vector<64x128xf32>
    %56 = vector.broadcast %5 : vector<1x128xf32> to vector<64x128xf32>
    %57 = arith.addf %55, %56 : vector<64x128xf32>
    %58 = vector.extract_strided_slice %57 {offsets = [0, 0], sizes = [64, 32], strides = [1, 1]} : vector<64x128xf32> to vector<64x32xf32>
    %c0_26 = arith.constant 0 : index
    %c0_27 = arith.constant 0 : index
    %59 = vector.load %arg2[%c0_26, %c0_27] : memref<64x32xf32, #tpu.memory_space<vmem>>, vector<64x32xf32>
    tpu.vector_store %arg2[%c0_26, %c0_27], %58 {strides = array<i32>} : memref<64x32xf32, #tpu.memory_space<vmem>>, vector<64x32xf32>,
    return
  }
}

</mosaic_0001>

<llo_original>
// kernel: branch_forward.1
$region0: #{branch_forward.1}
  #allocation0 [shape = 'u32[]', space=smem, size = 0x4, offset = 0x4, fixed_abs, tag = 'smem constant byte address 0x4 - core index']
  #allocation1 [shape = 'u32[144,128]{1,0:T(1,128)}', space=vmem, size = 0x12000, scoped, tag = 'internal scratch']
  %s0 = inlined_call_operand.vmem [shape: f32[64,32], index: 0, kind: input, shape index: {}]
  %s1 = inlined_call_operand.hbm [shape: f32[520,128], index: 1, kind: input, shape index: {}]
  %s2 = inlined_call_operand.vmem [shape: f32[64,32], index: 2, kind: output, shape index: {}]
  %s3 = sld [smem:[#allocation0]]
  $region22: #{branch_forward.1} parent=0
    _
  %s5 = ssub.s32 1, %s3
  %s6 = scalar_select 0, %s5, %s3
  $region1: #{branch_forward.1} parent=0
    #allocation2 [shape = 'u8[266240]{0}', space=vmem, size = 0x41000, scoped, tag = 'input window, operand 1, single buffered']
    #allocation3 [shape = 's32[1]{0}', space=sflag, size = 0x4, scoped, tag = 'scoped memory for branch_forward.1']
    %7 = vsyncpa [#allocation3], 0
    // Predicated region
    $region2: #{branch_forward.1} parent=1 // pred_check
      _
    $region3: #{branch_forward.1} parent=1 // pred_check_branch
      %9 = sbr.rel (0) target = $region5
    $region4: #{branch_forward.1} parent=1 // pred_region
      _
    $region5: #{branch_forward.1} parent=1 // pred_fallthru
      _
    // Predicated region
    $region6: #{branch_forward.1} parent=1 // pred_check
      _
    $region7: #{branch_forward.1} parent=1 // pred_check_branch
      %11 = sbr.rel (0) target = $region9
    $region8: #{branch_forward.1} parent=1 // pred_region
      %s13 = ssub.s32 8320, 8320
      %14 = vsyncadd [#allocation3], %s13
      %s15 = sshll.u32 [#allocation2], 4
      %s16 = int_to_ptr.vmem [resolvable:$true] %s15
      %21 = dma.hbm_to_vmem [thread:$0]  %s1, 8320, %s16, [#allocation3], 128, 128, 8
    $region9: #{branch_forward.1} parent=1 // pred_fallthru
      _
    // Predicated region
    $region10: #{branch_forward.1} parent=1 // pred_check
      _
    $region11: #{branch_forward.1} parent=1 // pred_check_branch
      %23 = sbr.rel (0) target = $region13
    $region12: #{branch_forward.1} parent=1 // pred_region
      %24 = dma.done [#allocation3], 8320
    $region13: #{branch_forward.1} parent=1 // pred_fallthru
      _
    %v25 = vld [vmem:[%s0] sm:$0xff]
    %v26 = vld [vmem:[%s0 + $0x8] sm:$0xff]
    %v27 = vld [vmem:[%s0 + $0x10] sm:$0xff]
    %v28 = vld [vmem:[%s0 + $0x18] sm:$0xff]
    %v29 = vld [vmem:[%s0 + $0x20] sm:$0xff]
    %v30 = vld [vmem:[%s0 + $0x28] sm:$0xff]
    %v31 = vld [vmem:[%s0 + $0x30] sm:$0xff]
    %v32 = vld [vmem:[%s0 + $0x38] sm:$0xff]
    %v33 = vld [vmem:[#allocation2 + $0x200] sm:$0x1]
    %v34 = vld [vmem:[#allocation2 + $0x201] sm:$0x1]
    %v35 = vld [vmem:[#allocation2 + $0x202] sm:$0x1]
    %v36 = vld [vmem:[#allocation2 + $0x203] sm:$0x1]
    %v37 = vld [vmem:[#allocation2 + $0x204] sm:$0x1]
    %v38 = vld [vmem:[#allocation2] sm:$0xff]
    %v39 = vld [vmem:[#allocation2 + $0x8] sm:$0xff]
    %v40 = vld [vmem:[#allocation2 + $0x10] sm:$0xff]
    %v41 = vld [vmem:[#allocation2 + $0x18] sm:$0xff]
    %v42 = vlaneseq
    %v43 = vshrl.u32 %v42, 7
    %v44 = vsub.s32 0, %v43
    %v45 = vrot.slane %v33, %v44
    %vm46 = vcmask 261120
    %v48 = vsel %vm46, %v25, 0
    %v51 = vsel %vm46, %v26, 0
    %v54 = vsel %vm46, %v27, 0
    %v57 = vsel %vm46, %v28, 0
    %v60 = vsel %vm46, %v29, 0
    %v63 = vsel %vm46, %v30, 0
    %v66 = vsel %vm46, %v31, 0
    %v69 = vsel %vm46, %v32, 0
    %71 = vmatprep.subr.mxu0 0.0
    %72 = vmatpush1.msra.mxu0 %v38
    %73 = vmatprep.subr.mxu0 0.0
    %74 = vmatpush1.msra.mxu0 %v39
    %75 = vmatprep.subr.mxu0 0.0
    %76 = vmatpush1.msra.mxu0 %v40
    %77 = vmatprep.subr.mxu0 0.0
    %78 = vmatpush1.msra.mxu0 %v41
    %79 = vmatprep.subr.mxu0 0.0
    %80 = vmatpush1.msra.mxu0 0.0
    %81 = vmatprep.subr.mxu0 0.0
    %82 = vmatpush1.msra.mxu0 0.0
    %83 = vmatprep.subr.mxu0 0.0
    %84 = vmatpush1.msra.mxu0 0.0
    %85 = vmatprep.subr.mxu0 0.0
    %86 = vmatpush1.msra.mxu0 0.0
    %87 = vmatprep.subr.mxu0 0.0
    %88 = vmatpush1.msra.mxu0 0.0
    %89 = vmatprep.subr.mxu0 0.0
    %90 = vmatpush1.msra.mxu0 0.0
    %91 = vmatprep.subr.mxu0 0.0
    %92 = vmatpush1.msra.mxu0 0.0
    %93 = vmatprep.subr.mxu0 0.0
    %94 = vmatpush1.msra.mxu0 0.0
    %95 = vmatprep.subr.mxu0 0.0
    %96 = vmatpush1.msra.mxu0 0.0
    %97 = vmatprep.subr.mxu0 0.0
    %98 = vmatpush1.msra.mxu0 0.0
    %99 = vmatprep.subr.mxu0 0.0
    %100 = vmatpush1.msra.mxu0 0.0
    %101 = vmatprep.subr.mxu0 0.0
    %102 = vmatpush1.msra.mxu0 0.0
    %103 = vmatprep.subr.mxu0 0.0
    %104 = vmatpush1.msra.mxu0 0.0
    %105 = vmatprep.subr.mxu0 0.0
    %106 = vmatpush1.msra.mxu0 0.0
    %107 = vmatprep.subr.mxu0 0.0
    %108 = vmatpush1.msra.mxu0 0.0
    %109 = vmatprep.subr.mxu0 0.0
    %110 = vmatpush1.msra.mxu0 0.0
    %111 = vmatprep.subr.mxu0 0.0
    %112 = vmatpush1.msra.mxu0 0.0
    %113 = vmatprep.subr.mxu0 0.0
    %114 = vmatpush1.msra.mxu0 0.0
    %115 = vmatprep.subr.mxu0 0.0
    %116 = vmatpush1.msra.mxu0 0.0
    %117 = vmatprep.subr.mxu0 0.0
    %118 = vmatpush1.msra.mxu0 0.0
    %119 = vmatprep.subr.mxu0 0.0
    %120 = vmatpush1.msra.mxu0 0.0
    %121 = vmatprep.subr.mxu0 0.0
    %122 = vmatpush1.msra.mxu0 0.0
    %123 = vmatprep.subr.mxu0 0.0
    %124 = vmatpush1.msra.mxu0 0.0
    %125 = vmatprep.subr.mxu0 0.0
    %126 = vmatpush1.msra.mxu0 0.0
    %127 = vmatprep.subr.mxu0 0.0
    %128 = vmatpush1.msra.mxu0 0.0
    %129 = vmatprep.subr.mxu0 0.0
    %130 = vmatpush1.msra.mxu0 0.0
    %131 = vmatprep.subr.mxu0 0.0
    %132 = vmatpush1.msra.mxu0 0.0
    %133 = vmatprep.subr.mxu0 0.0
    %134 = vmatpush1.msra.mxu0 0.0
    %135 = vmatprep.mubr.f32.mxu0 0.0
    %136 = vmatmul.mubr.f32.gmra.mrb[0].mxu0 %v48
    %v137 = vpop.f32.mrb[0].mxu0
    %v138 = vadd.f32 %v45, %v137
    %v139 = vpop.f32.mrb[0].mxu0
    %140 = vmatprep.mubr.f32.mxu0 0.0
    %141 = vmatmul.mubr.f32.gmra.mrb[0].mxu0 %v51
    %v142 = vpop.f32.mrb[0].mxu0
    %v143 = vadd.f32 %v45, %v142
    %v144 = vpop.f32.mrb[0].mxu0
    %145 = vmatprep.mubr.f32.mxu0 0.0
    %146 = vmatmul.mubr.f32.gmra.mrb[0].mxu0 %v54
    %v147 = vpop.f32.mrb[0].mxu0
    %v148 = vadd.f32 %v45, %v147
    %v149 = vpop.f32.mrb[0].mxu0
    %150 = vmatprep.mubr.f32.mxu0 0.0
    %151 = vmatmul.mubr.f32.gmra.mrb[0].mxu0 %v57
    %v152 = vpop.f32.mrb[0].mxu0
    %v153 = vadd.f32 %v45, %v152
    %v154 = vpop.f32.mrb[0].mxu0
    %155 = vmatprep.mubr.f32.mxu0 0.0
    %156 = vmatmul.mubr.f32.gmra.mrb[0].mxu0 %v60
    %v157 = vpop.f32.mrb[0].mxu0
    %v158 = vadd.f32 %v45, %v157
    %v159 = vpop.f32.mrb[0].mxu0
    %160 = vmatprep.mubr.f32.mxu0 0.0
    %161 = vmatmul.mubr.f32.gmra.mrb[0].mxu0 %v63
    %v162 = vpop.f32.mrb[0].mxu0
    %v163 = vadd.f32 %v45, %v162
    %v164 = vpop.f32.mrb[0].mxu0
    %165 = vmatprep.mubr.f32.mxu0 0.0
    %166 = vmatmul.mubr.f32.gmra.mrb[0].mxu0 %v66
    %v167 = vpop.f32.mrb[0].mxu0
    %v168 = vadd.f32 %v45, %v167
    %v169 = vpop.f32.mrb[0].mxu0
    %170 = vmatprep.mubr.f32.mxu0 0.0
    %171 = vmatmul.mubr.f32.gmra.mrb[0].mxu0 %v69
    %v172 = vpop.f32.mrb[0].mxu0
    %v173 = vadd.f32 %v45, %v172
    %v174 = vpop.f32.mrb[0].mxu0
    %175 = vdwg.mxu0
    %v176 = vmax.f32 %v138, 0.0
    %v177 = vmax.f32 %v143, 0.0
    %v178 = vmax.f32 %v148, 0.0
    %v179 = vmax.f32 %v153, 0.0
    %v180 = vmax.f32 %v158, 0.0
    %v181 = vmax.f32 %v163, 0.0
    %v182 = vmax.f32 %v168, 0.0
    %v183 = vmax.f32 %v173, 0.0
    %v184 = vld [vmem:[#allocation2 + $0x80] sm:$0xff]
    %v185 = vld [vmem:[#allocation2 + $0x88] sm:$0xff]
    %v186 = vld [vmem:[#allocation2 + $0x90] sm:$0xff]
    %v187 = vld [vmem:[#allocation2 + $0x98] sm:$0xff]
    %v188 = vld [vmem:[#allocation2 + $0xa0] sm:$0xff]
    %v189 = vld [vmem:[#allocation2 + $0xa8] sm:$0xff]
    %v190 = vld [vmem:[#allocation2 + $0xb0] sm:$0xff]
    %v191 = vld [vmem:[#allocation2 + $0xb8] sm:$0xff]
    %v192 = vld [vmem:[#allocation2 + $0xc0] sm:$0xff]
    %v193 = vld [vmem:[#allocation2 + $0xc8] sm:$0xff]
    %v194 = vld [vmem:[#allocation2 + $0xd0] sm:$0xff]
    %v195 = vld [vmem:[#allocation2 + $0xd8] sm:$0xff]
    %v196 = vld [vmem:[#allocation2 + $0xe0] sm:$0xff]
    %v197 = vld [vmem:[#allocation2 + $0xe8] sm:$0xff]
    %v198 = vld [vmem:[#allocation2 + $0xf0] sm:$0xff]
    %v199 = vld [vmem:[#allocation2 + $0xf8] sm:$0xff]
    %200 = vmatprep.subr.mxu0 0.0
    %201 = vmatpush1.msra.mxu0 %v184
    %202 = vmatprep.subr.mxu0 0.0
    %203 = vmatpush1.msra.mxu0 %v185
    %204 = vmatprep.subr.mxu0 0.0
    %205 = vmatpush1.msra.mxu0 %v186
    %206 = vmatprep.subr.mxu0 0.0
    %207 = vmatpush1.msra.mxu0 %v187
    %208 = vmatprep.subr.mxu0 0.0
    %209 = vmatpush1.msra.mxu0 %v188
    %210 = vmatprep.subr.mxu0 0.0
    %211 = vmatpush1.msra.mxu0 %v189
    %212 = vmatprep.subr.mxu0 0.0
    %213 = vmatpush1.msra.mxu0 %v190
    %214 = vmatprep.subr.mxu0 0.0
    %215 = vmatpush1.msra.mxu0 %v191
    %216 = vmatprep.subr.mxu0 0.0
    %217 = vmatpush1.msra.mxu0 %v192
    %218 = vmatprep.subr.mxu0 0.0
    %219 = vmatpush1.msra.mxu0 %v193
    %220 = vmatprep.subr.mxu0 0.0
    %221 = vmatpush1.msra.mxu0 %v194
    %222 = vmatprep.subr.mxu0 0.0
    %223 = vmatpush1.msra.mxu0 %v195
    %224 = vmatprep.subr.mxu0 0.0
    %225 = vmatpush1.msra.mxu0 %v196
    %226 = vmatprep.subr.mxu0 0.0
    %227 = vmatpush1.msra.mxu0 %v197
    %228 = vmatprep.subr.mxu0 0.0
    %229 = vmatpush1.msra.mxu0 %v198
    %230 = vmatprep.subr.mxu0 0.0
    %231 = vmatpush1.msra.mxu0 %v199
    %232 = vmatprep.subr.mxu0 0.0
    %233 = vmatpush1.msra.mxu0 0.0
    %234 = vmatprep.subr.mxu0 0.0
    %235 = vmatpush1.msra.mxu0 0.0
    %236 = vmatprep.subr.mxu0 0.0
    %237 = vmatpush1.msra.mxu0 0.0
    %238 = vmatprep.subr.mxu0 0.0
    %239 = vmatpush1.msra.mxu0 0.0
    %240 = vmatprep.subr.mxu0 0.0
    %241 = vmatpush1.msra.mxu0 0.0
    %242 = vmatprep.subr.mxu0 0.0
    %243 = vmatpush1.msra.mxu0 0.0
    %244 = vmatprep.subr.mxu0 0.0
    %245 = vmatpush1.msra.mxu0 0.0
    %246 = vmatprep.subr.mxu0 0.0
    %247 = vmatpush1.msra.mxu0 0.0
    %248 = vmatprep.subr.mxu0 0.0
    %249 = vmatpush1.msra.mxu0 0.0
    %250 = vmatprep.subr.mxu0 0.0
    %251 = vmatpush1.msra.mxu0 0.0
    %252 = vmatprep.subr.mxu0 0.0
    %253 = vmatpush1.msra.mxu0 0.0
    %254 = vmatprep.subr.mxu0 0.0
    %255 = vmatpush1.msra.mxu0 0.0
    %256 = vmatprep.subr.mxu0 0.0
    %257 = vmatpush1.msra.mxu0 0.0
    %258 = vmatprep.subr.mxu0 0.0
    %259 = vmatpush1.msra.mxu0 0.0
    %260 = vmatprep.subr.mxu0 0.0
    %261 = vmatpush1.msra.mxu0 0.0
    %262 = vmatprep.subr.mxu0 0.0
    %263 = vmatpush1.msra.mxu0 0.0
    %264 = vmatprep.mubr.f32.mxu0 0.0
    %265 = vmatmul.mubr.f32.gmra.mrb[0].mxu0 %v176
    %v266 = vpop.f32.mrb[0].mxu0
    %v267 = vadd.f32 0.0, %v266
    %v268 = vpop.f32.mrb[0].mxu0
    %269 = vmatprep.mubr.f32.mxu0 0.0
    %270 = vmatmul.mubr.f32.gmra.mrb[0].mxu0 %v177
    %v271 = vpop.f32.mrb[0].mxu0
    %v272 = vadd.f32 0.0, %v271
    %v273 = vpop.f32.mrb[0].mxu0
    %274 = vmatprep.mubr.f32.mxu0 0.0
    %275 = vmatmul.mubr.f32.gmra.mrb[0].mxu0 %v178
    %v276 = vpop.f32.mrb[0].mxu0
    %v277 = vadd.f32 0.0, %v276
    %v278 = vpop.f32.mrb[0].mxu0
    %279 = vmatprep.mubr.f32.mxu0 0.0
    %280 = vmatmul.mubr.f32.gmra.mrb[0].mxu0 %v179
    %v281 = vpop.f32.mrb[0].mxu0
    %v282 = vadd.f32 0.0, %v281
    %v283 = vpop.f32.mrb[0].mxu0
    %284 = vmatprep.mubr.f32.mxu0 0.0
    %285 = vmatmul.mubr.f32.gmra.mrb[0].mxu0 %v180
    %v286 = vpop.f32.mrb[0].mxu0
    %v287 = vadd.f32 0.0, %v286
    %v288 = vpop.f32.mrb[0].mxu0
    %289 = vmatprep.mubr.f32.mxu0 0.0
    %290 = vmatmul.mubr.f32.gmra.mrb[0].mxu0 %v181
    %v291 = vpop.f32.mrb[0].mxu0
    %v292 = vadd.f32 0.0, %v291
    %v293 = vpop.f32.mrb[0].mxu0
    %294 = vmatprep.mubr.f32.mxu0 0.0
    %295 = vmatmul.mubr.f32.gmra.mrb[0].mxu0 %v182
    %v296 = vpop.f32.mrb[0].mxu0
    %v297 = vadd.f32 0.0, %v296
    %v298 = vpop.f32.mrb[0].mxu0
    %299 = vmatprep.mubr.f32.mxu0 0.0
    %300 = vmatmul.mubr.f32.gmra.mrb[0].mxu0 %v183
    %v301 = vpop.f32.mrb[0].mxu0
    %v302 = vadd.f32 0.0, %v301
    %v303 = vpop.f32.mrb[0].mxu0
    %304 = vdwg.mxu0
    %v305 = vld [vmem:[#allocation2 + $0x100] sm:$0xff]
    %v306 = vld [vmem:[#allocation2 + $0x108] sm:$0xff]
    %v307 = vld [vmem:[#allocation2 + $0x110] sm:$0xff]
    %v308 = vld [vmem:[#allocation2 + $0x118] sm:$0xff]
    %v309 = vld [vmem:[#allocation2 + $0x120] sm:$0xff]
    %v310 = vld [vmem:[#allocation2 + $0x128] sm:$0xff]
    %v311 = vld [vmem:[#allocation2 + $0x130] sm:$0xff]
    %v312 = vld [vmem:[#allocation2 + $0x138] sm:$0xff]
    %v313 = vld [vmem:[#allocation2 + $0x140] sm:$0xff]
    %v314 = vld [vmem:[#allocation2 + $0x148] sm:$0xff]
    %v315 = vld [vmem:[#allocation2 + $0x150] sm:$0xff]
    %v316 = vld [vmem:[#allocation2 + $0x158] sm:$0xff]
    %v317 = vld [vmem:[#allocation2 + $0x160] sm:$0xff]
    %v318 = vld [vmem:[#allocation2 + $0x168] sm:$0xff]
    %v319 = vld [vmem:[#allocation2 + $0x170] sm:$0xff]
    %v320 = vld [vmem:[#allocation2 + $0x178] sm:$0xff]
    %321 = vmatprep.subr.mxu0 0.0
    %322 = vmatpush1.msra.mxu0 %v305
    %323 = vmatprep.subr.mxu0 0.0
    %324 = vmatpush1.msra.mxu0 %v306
    %325 = vmatprep.subr.mxu0 0.0
    %326 = vmatpush1.msra.mxu0 %v307
    %327 = vmatprep.subr.mxu0 0.0
    %328 = vmatpush1.msra.mxu0 %v308
    %329 = vmatprep.subr.mxu0 0.0
    %330 = vmatpush1.msra.mxu0 %v309
    %331 = vmatprep.subr.mxu0 0.0
    %332 = vmatpush1.msra.mxu0 %v310
    %333 = vmatprep.subr.mxu0 0.0
    %334 = vmatpush1.msra.mxu0 %v311
    %335 = vmatprep.subr.mxu0 0.0
    %336 = vmatpush1.msra.mxu0 %v312
    %337 = vmatprep.subr.mxu0 0.0
    %338 = vmatpush1.msra.mxu0 %v313
    %339 = vmatprep.subr.mxu0 0.0
    %340 = vmatpush1.msra.mxu0 %v314
    %341 = vmatprep.subr.mxu0 0.0
    %342 = vmatpush1.msra.mxu0 %v315
    %343 = vmatprep.subr.mxu0 0.0
    %344 = vmatpush1.msra.mxu0 %v316
    %345 = vmatprep.subr.mxu0 0.0
    %346 = vmatpush1.msra.mxu0 %v317
    %347 = vmatprep.subr.mxu0 0.0
    %348 = vmatpush1.msra.mxu0 %v318
    %349 = vmatprep.subr.mxu0 0.0
    %350 = vmatpush1.msra.mxu0 %v319
    %351 = vmatprep.subr.mxu0 0.0
    %352 = vmatpush1.msra.mxu0 %v320
    %353 = vmatprep.subr.mxu0 0.0
    %354 = vmatpush1.msra.mxu0 0.0
    %355 = vmatprep.subr.mxu0 0.0
    %356 = vmatpush1.msra.mxu0 0.0
    %357 = vmatprep.subr.mxu0 0.0
    %358 = vmatpush1.msra.mxu0 0.0
    %359 = vmatprep.subr.mxu0 0.0
    %360 = vmatpush1.msra.mxu0 0.0
    %361 = vmatprep.subr.mxu0 0.0
    %362 = vmatpush1.msra.mxu0 0.0
    %363 = vmatprep.subr.mxu0 0.0
    %364 = vmatpush1.msra.mxu0 0.0
    %365 = vmatprep.subr.mxu0 0.0
    %366 = vmatpush1.msra.mxu0 0.0
    %367 = vmatprep.subr.mxu0 0.0
    %368 = vmatpush1.msra.mxu0 0.0
    %369 = vmatprep.subr.mxu0 0.0
    %370 = vmatpush1.msra.mxu0 0.0
    %371 = vmatprep.subr.mxu0 0.0
    %372 = vmatpush1.msra.mxu0 0.0
    %373 = vmatprep.subr.mxu0 0.0
    %374 = vmatpush1.msra.mxu0 0.0
    %375 = vmatprep.subr.mxu0 0.0
    %376 = vmatpush1.msra.mxu0 0.0
    %377 = vmatprep.subr.mxu0 0.0
    %378 = vmatpush1.msra.mxu0 0.0
    %379 = vmatprep.subr.mxu0 0.0
    %380 = vmatpush1.msra.mxu0 0.0
    %381 = vmatprep.subr.mxu0 0.0
    %382 = vmatpush1.msra.mxu0 0.0
    %383 = vmatprep.subr.mxu0 0.0
    %384 = vmatpush1.msra.mxu0 0.0
    %385 = vmatprep.mubr.f32.mxu0 0.0
    %386 = vmatmul.mubr.f32.gmra.mrb[0].mxu0 %v267
    %v387 = vpop.f32.mrb[0].mxu0
    %v388 = vadd.f32 0.0, %v387
    %v389 = vpop.f32.mrb[0].mxu0
    %390 = vmatprep.mubr.f32.mxu0 0.0
    %391 = vmatmul.mubr.f32.gmra.mrb[0].mxu0 %v272
    %v392 = vpop.f32.mrb[0].mxu0
    %v393 = vadd.f32 0.0, %v392
    %v394 = vpop.f32.mrb[0].mxu0
    %395 = vmatprep.mubr.f32.mxu0 0.0
    %396 = vmatmul.mubr.f32.gmra.mrb[0].mxu0 %v277
    %v397 = vpop.f32.mrb[0].mxu0
    %v398 = vadd.f32 0.0, %v397
    %v399 = vpop.f32.mrb[0].mxu0
    %400 = vmatprep.mubr.f32.mxu0 0.0
    %401 = vmatmul.mubr.f32.gmra.mrb[0].mxu0 %v282
    %v402 = vpop.f32.mrb[0].mxu0
    %v403 = vadd.f32 0.0, %v402
    %v404 = vpop.f32.mrb[0].mxu0
    %405 = vmatprep.mubr.f32.mxu0 0.0
    %406 = vmatmul.mubr.f32.gmra.mrb[0].mxu0 %v287
    %v407 = vpop.f32.mrb[0].mxu0
    %v408 = vadd.f32 0.0, %v407
    %v409 = vpop.f32.mrb[0].mxu0
    %410 = vmatprep.mubr.f32.mxu0 0.0
    %411 = vmatmul.mubr.f32.gmra.mrb[0].mxu0 %v292
    %v412 = vpop.f32.mrb[0].mxu0
    %v413 = vadd.f32 0.0, %v412
    %v414 = vpop.f32.mrb[0].mxu0
    %415 = vmatprep.mubr.f32.mxu0 0.0
    %416 = vmatmul.mubr.f32.gmra.mrb[0].mxu0 %v297
    %v417 = vpop.f32.mrb[0].mxu0
    %v418 = vadd.f32 0.0, %v417
    %v419 = vpop.f32.mrb[0].mxu0
    %420 = vmatprep.mubr.f32.mxu0 0.0
    %421 = vmatmul.mubr.f32.gmra.mrb[0].mxu0 %v302
    %v422 = vpop.f32.mrb[0].mxu0
    %v423 = vadd.f32 0.0, %v422
    %v424 = vpop.f32.mrb[0].mxu0
    %425 = vdwg.mxu0
    %v426 = vadd.f32 %v388, %v393
    %v427 = vadd.f32 %v426, %v398
    %v428 = vadd.f32 %v427, %v403
    %v429 = vadd.f32 %v428, %v408
    %v430 = vadd.f32 %v429, %v413
    %v431 = vadd.f32 %v430, %v418
    %v432 = vadd.f32 %v431, %v423
    %v433 = vrot.slane %v432, 4
    %v434 = vadd.f32 %v432, %v433
    %v435 = vrot.slane %v434, 2
    %v436 = vadd.f32 %v434, %v435
    %v437 = vrot.slane %v436, 1
    %v438 = vadd.f32 %v436, %v437
    %v439 = vrcp.pop 64.0
    %v440 = vmul.f32 %v438, %v439
    %v441 = vsub.f32 %v388, %v440
    %v442 = vsub.f32 %v393, %v440
    %v443 = vsub.f32 %v398, %v440
    %v444 = vsub.f32 %v403, %v440
    %v445 = vsub.f32 %v408, %v440
    %v446 = vsub.f32 %v413, %v440
    %v447 = vsub.f32 %v418, %v440
    %v448 = vsub.f32 %v423, %v440
    %v449 = vmul.f32 %v441, %v441
    %v450 = vmul.f32 %v442, %v442
    %v451 = vmul.f32 %v443, %v443
    %v452 = vmul.f32 %v444, %v444
    %v453 = vmul.f32 %v445, %v445
    %v454 = vmul.f32 %v446, %v446
    %v455 = vmul.f32 %v447, %v447
    %v456 = vmul.f32 %v448, %v448
    %v457 = vadd.f32 %v449, %v450
    %v458 = vadd.f32 %v457, %v451
    %v459 = vadd.f32 %v458, %v452
    %v460 = vadd.f32 %v459, %v453
    %v461 = vadd.f32 %v460, %v454
    %v462 = vadd.f32 %v461, %v455
    %v463 = vadd.f32 %v462, %v456
    %v464 = vrot.slane %v463, 4
    %v465 = vadd.f32 %v463, %v464
    %v466 = vrot.slane %v465, 2
    %v467 = vadd.f32 %v465, %v466
    %v468 = vrot.slane %v467, 1
    %v469 = vadd.f32 %v467, %v468
    %v470 = vmul.f32 %v469, %v439
    %v471 = vadd.f32 %v470, 1e-05
    %v472 = vrsqrt.pop %v471
    %v473 = vmul.f32 %v34, %v472
    %v474 = vlaneseq
    %v475 = vshrl.u32 %v474, 7
    %v476 = vsub.s32 0, %v475
    %v477 = vrot.slane %v473, %v476
    %v478 = vmul.f32 %v441, %v477
    %v479 = vmul.f32 %v442, %v477
    %v480 = vmul.f32 %v443, %v477
    %v481 = vmul.f32 %v444, %v477
    %v482 = vmul.f32 %v445, %v477
    %v483 = vmul.f32 %v446, %v477
    %v484 = vmul.f32 %v447, %v477
    %v485 = vmul.f32 %v448, %v477
    %v486 = vlaneseq
    %v487 = vshrl.u32 %v486, 7
    %v488 = vsub.s32 0, %v487
    %v489 = vrot.slane %v35, %v488
    %v490 = vadd.f32 %v478, %v489
    %v491 = vadd.f32 %v479, %v489
    %v492 = vadd.f32 %v480, %v489
    %v493 = vadd.f32 %v481, %v489
    %v494 = vadd.f32 %v482, %v489
    %v495 = vadd.f32 %v483, %v489
    %v496 = vadd.f32 %v484, %v489
    %v497 = vadd.f32 %v485, %v489
    %v498 = vmax.f32 %v490, 0.0
    %v499 = vmax.f32 %v491, 0.0
    %v500 = vmax.f32 %v492, 0.0
    %v501 = vmax.f32 %v493, 0.0
    %v502 = vmax.f32 %v494, 0.0
    %v503 = vmax.f32 %v495, 0.0
    %v504 = vmax.f32 %v496, 0.0
    %v505 = vmax.f32 %v497, 0.0
    %v506 = vld [vmem:[#allocation2 + $0x180] sm:$0xff]
    %v507 = vld [vmem:[#allocation2 + $0x188] sm:$0xff]
    %v508 = vld [vmem:[#allocation2 + $0x190] sm:$0xff]
    %v509 = vld [vmem:[#allocation2 + $0x198] sm:$0xff]
    %v510 = vld [vmem:[#allocation2 + $0x1a0] sm:$0xff]
    %v511 = vld [vmem:[#allocation2 + $0x1a8] sm:$0xff]
    %v512 = vld [vmem:[#allocation2 + $0x1b0] sm:$0xff]
    %v513 = vld [vmem:[#allocation2 + $0x1b8] sm:$0xff]
    %v514 = vld [vmem:[#allocation2 + $0x1c0] sm:$0xff]
    %v515 = vld [vmem:[#allocation2 + $0x1c8] sm:$0xff]
    %v516 = vld [vmem:[#allocation2 + $0x1d0] sm:$0xff]
    %v517 = vld [vmem:[#allocation2 + $0x1d8] sm:$0xff]
    %v518 = vld [vmem:[#allocation2 + $0x1e0] sm:$0xff]
    %v519 = vld [vmem:[#allocation2 + $0x1e8] sm:$0xff]
    %v520 = vld [vmem:[#allocation2 + $0x1f0] sm:$0xff]
    %v521 = vld [vmem:[#allocation2 + $0x1f8] sm:$0xff]
    %522 = vmatprep.subr.mxu0 0.0
    %523 = vmatpush1.msra.mxu0 %v506
    %524 = vmatprep.subr.mxu0 0.0
    %525 = vmatpush1.msra.mxu0 %v507
    %526 = vmatprep.subr.mxu0 0.0
    %527 = vmatpush1.msra.mxu0 %v508
    %528 = vmatprep.subr.mxu0 0.0
    %529 = vmatpush1.msra.mxu0 %v509
    %530 = vmatprep.subr.mxu0 0.0
    %531 = vmatpush1.msra.mxu0 %v510
    %532 = vmatprep.subr.mxu0 0.0
    %533 = vmatpush1.msra.mxu0 %v511
    %534 = vmatprep.subr.mxu0 0.0
    %535 = vmatpush1.msra.mxu0 %v512
    %536 = vmatprep.subr.mxu0 0.0
    %537 = vmatpush1.msra.mxu0 %v513
    %538 = vmatprep.subr.mxu0 0.0
    %539 = vmatpush1.msra.mxu0 %v514
    %540 = vmatprep.subr.mxu0 0.0
    %541 = vmatpush1.msra.mxu0 %v515
    %542 = vmatprep.subr.mxu0 0.0
    %543 = vmatpush1.msra.mxu0 %v516
    %544 = vmatprep.subr.mxu0 0.0
    %545 = vmatpush1.msra.mxu0 %v517
    %546 = vmatprep.subr.mxu0 0.0
    %547 = vmatpush1.msra.mxu0 %v518
    %548 = vmatprep.subr.mxu0 0.0
    %549 = vmatpush1.msra.mxu0 %v519
    %550 = vmatprep.subr.mxu0 0.0
    %551 = vmatpush1.msra.mxu0 %v520
    %552 = vmatprep.subr.mxu0 0.0
    %553 = vmatpush1.msra.mxu0 %v521
    %554 = vmatprep.subr.mxu0 0.0
    %555 = vmatpush1.msra.mxu0 0.0
    %556 = vmatprep.subr.mxu0 0.0
    %557 = vmatpush1.msra.mxu0 0.0
    %558 = vmatprep.subr.mxu0 0.0
    %559 = vmatpush1.msra.mxu0 0.0
    %560 = vmatprep.subr.mxu0 0.0
    %561 = vmatpush1.msra.mxu0 0.0
    %562 = vmatprep.subr.mxu0 0.0
    %563 = vmatpush1.msra.mxu0 0.0
    %564 = vmatprep.subr.mxu0 0.0
    %565 = vmatpush1.msra.mxu0 0.0
    %566 = vmatprep.subr.mxu0 0.0
    %567 = vmatpush1.msra.mxu0 0.0
    %568 = vmatprep.subr.mxu0 0.0
    %569 = vmatpush1.msra.mxu0 0.0
    %570 = vmatprep.subr.mxu0 0.0
    %571 = vmatpush1.msra.mxu0 0.0
    %572 = vmatprep.subr.mxu0 0.0
    %573 = vmatpush1.msra.mxu0 0.0
    %574 = vmatprep.subr.mxu0 0.0
    %575 = vmatpush1.msra.mxu0 0.0
    %576 = vmatprep.subr.mxu0 0.0
    %577 = vmatpush1.msra.mxu0 0.0
    %578 = vmatprep.subr.mxu0 0.0
    %579 = vmatpush1.msra.mxu0 0.0
    %580 = vmatprep.subr.mxu0 0.0
    %581 = vmatpush1.msra.mxu0 0.0
    %582 = vmatprep.subr.mxu0 0.0
    %583 = vmatpush1.msra.mxu0 0.0
    %584 = vmatprep.subr.mxu0 0.0
    %585 = vmatpush1.msra.mxu0 0.0
    %586 = vmatprep.mubr.f32.mxu0 0.0
    %587 = vmatmul.mubr.f32.gmra.mrb[0].mxu0 %v498
    %v588 = vpop.f32.mrb[0].mxu0
    %v589 = vadd.f32 0.0, %v588
    %v590 = vpop.f32.mrb[0].mxu0
    %591 = vmatprep.mubr.f32.mxu0 0.0
    %592 = vmatmul.mubr.f32.gmra.mrb[0].mxu0 %v499
    %v593 = vpop.f32.mrb[0].mxu0
    %v594 = vadd.f32 0.0, %v593
    %v595 = vpop.f32.mrb[0].mxu0
    %596 = vmatprep.mubr.f32.mxu0 0.0
    %597 = vmatmul.mubr.f32.gmra.mrb[0].mxu0 %v500
    %v598 = vpop.f32.mrb[0].mxu0
    %v599 = vadd.f32 0.0, %v598
    %v600 = vpop.f32.mrb[0].mxu0
    %601 = vmatprep.mubr.f32.mxu0 0.0
    %602 = vmatmul.mubr.f32.gmra.mrb[0].mxu0 %v501
    %v603 = vpop.f32.mrb[0].mxu0
    %v604 = vadd.f32 0.0, %v603
    %v605 = vpop.f32.mrb[0].mxu0
    %606 = vmatprep.mubr.f32.mxu0 0.0
    %607 = vmatmul.mubr.f32.gmra.mrb[0].mxu0 %v502
    %v608 = vpop.f32.mrb[0].mxu0
    %v609 = vadd.f32 0.0, %v608
    %v610 = vpop.f32.mrb[0].mxu0
    %611 = vmatprep.mubr.f32.mxu0 0.0
    %612 = vmatmul.mubr.f32.gmra.mrb[0].mxu0 %v503
    %v613 = vpop.f32.mrb[0].mxu0
    %v614 = vadd.f32 0.0, %v613
    %v615 = vpop.f32.mrb[0].mxu0
    %616 = vmatprep.mubr.f32.mxu0 0.0
    %617 = vmatmul.mubr.f32.gmra.mrb[0].mxu0 %v504
    %v618 = vpop.f32.mrb[0].mxu0
    %v619 = vadd.f32 0.0, %v618
    %v620 = vpop.f32.mrb[0].mxu0
    %621 = vmatprep.mubr.f32.mxu0 0.0
    %622 = vmatmul.mubr.f32.gmra.mrb[0].mxu0 %v505
    %v623 = vpop.f32.mrb[0].mxu0
    %v624 = vadd.f32 0.0, %v623
    %v625 = vpop.f32.mrb[0].mxu0
    %626 = vdwg.mxu0
    %v627 = vadd.f32 %v589, %v594
    %v628 = vadd.f32 %v627, %v599
    %v629 = vadd.f32 %v628, %v604
    %v630 = vadd.f32 %v629, %v609
    %v631 = vadd.f32 %v630, %v614
    %v632 = vadd.f32 %v631, %v619
    %v633 = vadd.f32 %v632, %v624
    %v634 = vrot.slane %v633, 4
    %v635 = vadd.f32 %v633, %v634
    %v636 = vrot.slane %v635, 2
    %v637 = vadd.f32 %v635, %v636
    %v638 = vrot.slane %v637, 1
    %v639 = vadd.f32 %v637, %v638
    %v640 = vmul.f32 %v639, %v439
    %v641 = vsub.f32 %v589, %v640
    %v642 = vsub.f32 %v594, %v640
    %v643 = vsub.f32 %v599, %v640
    %v644 = vsub.f32 %v604, %v640
    %v645 = vsub.f32 %v609, %v640
    %v646 = vsub.f32 %v614, %v640
    %v647 = vsub.f32 %v619, %v640
    %v648 = vsub.f32 %v624, %v640
    %v649 = vmul.f32 %v641, %v641
    %v650 = vmul.f32 %v642, %v642
    %v651 = vmul.f32 %v643, %v643
    %v652 = vmul.f32 %v644, %v644
    %v653 = vmul.f32 %v645, %v645
    %v654 = vmul.f32 %v646, %v646
    %v655 = vmul.f32 %v647, %v647
    %v656 = vmul.f32 %v648, %v648
    %v657 = vadd.f32 %v649, %v650
    %v658 = vadd.f32 %v657, %v651
    %v659 = vadd.f32 %v658, %v652
    %v660 = vadd.f32 %v659, %v653
    %v661 = vadd.f32 %v660, %v654
    %v662 = vadd.f32 %v661, %v655
    %v663 = vadd.f32 %v662, %v656
    %v664 = vrot.slane %v663, 4
    %v665 = vadd.f32 %v663, %v664
    %v666 = vrot.slane %v665, 2
    %v667 = vadd.f32 %v665, %v666
    %v668 = vrot.slane %v667, 1
    %v669 = vadd.f32 %v667, %v668
    %v670 = vmul.f32 %v669, %v439
    %v671 = vadd.f32 %v670, 1e-05
    %v672 = vrsqrt.pop %v671
    %v673 = vmul.f32 %v36, %v672
    %v674 = vlaneseq
    %v675 = vshrl.u32 %v674, 7
    %v676 = vsub.s32 0, %v675
    %v677 = vrot.slane %v673, %v676
    %v678 = vmul.f32 %v641, %v677
    %v679 = vmul.f32 %v642, %v677
    %v680 = vmul.f32 %v643, %v677
    %v681 = vmul.f32 %v644, %v677
    %v682 = vmul.f32 %v645, %v677
    %v683 = vmul.f32 %v646, %v677
    %v684 = vmul.f32 %v647, %v677
    %v685 = vmul.f32 %v648, %v677
    %v686 = vlaneseq
    %v687 = vshrl.u32 %v686, 7
    %v688 = vsub.s32 0, %v687
    %v689 = vrot.slane %v37, %v688
    %v690 = vadd.f32 %v678, %v689
    %v691 = vadd.f32 %v679, %v689
    %v692 = vadd.f32 %v680, %v689
    %v693 = vadd.f32 %v681, %v689
    %v694 = vadd.f32 %v682, %v689
    %v695 = vadd.f32 %v683, %v689
    %v696 = vadd.f32 %v684, %v689
    %v697 = vadd.f32 %v685, %v689
    %698 = vst.msk [vmem:[%s2] sm:$0xff] %vm46, %v690
    %699 = vst.msk [vmem:[%s2 + $0x8] sm:$0xff] %vm46, %v691
    %700 = vst.msk [vmem:[%s2 + $0x10] sm:$0xff] %vm46, %v692
    %701 = vst.msk [vmem:[%s2 + $0x18] sm:$0xff] %vm46, %v693
    %702 = vst.msk [vmem:[%s2 + $0x20] sm:$0xff] %vm46, %v694
    %703 = vst.msk [vmem:[%s2 + $0x28] sm:$0xff] %vm46, %v695
    %704 = vst.msk [vmem:[%s2 + $0x30] sm:$0xff] %vm46, %v696
    %705 = vst.msk [vmem:[%s2 + $0x38] sm:$0xff] %vm46, %v697
    // Predicated region
    $region14: #{branch_forward.1} parent=1 // pred_check
      _
    $region15: #{branch_forward.1} parent=1 // pred_check_branch
      %707 = sbr.rel (0) target = $region17
    $region16: #{branch_forward.1} parent=1 // pred_region
      _
    $region17: #{branch_forward.1} parent=1 // pred_fallthru
      _
    // Predicated region
    $region18: #{branch_forward.1} parent=1 // pred_check
      _
    $region19: #{branch_forward.1} parent=1 // pred_check_branch
      %709 = sbr.rel (0) target = $region21
    $region20: #{branch_forward.1} parent=1 // pred_region
      _
    $region21: #{branch_forward.1} parent=1 // pred_fallthru
      _
    %710 = vsyncpa [#allocation3], 1

</llo_original>
